<compile_context>
chip_gen: v6e
topology: v6e:2x2x1
jax: 0.10.0
libtpu: 0.0.40
codegen_flags: <defaults>
</compile_context>

<pallas_src>
import jax
import jax.numpy as jnp
import numpy as np
from jax.experimental import pallas as pl
from jax.experimental.pallas import tpu as pltpu


def _gated_fusion_kernel(
    hs_ref, ht_ref,
    w_gate_ref, c_gate_ref,   # (2D, D) BN-folded [W_xs'; W_xt'], (1, D) gate shift
    w_h1_ref, c_h1_ref,       # (D, D)  BN-folded,                (1, D) shift
    w_h2_ref, c_h2_ref,       # (D, D)  BN-folded,                (1, D) shift
    out_ref,
):
    d = hs_ref.shape[-1]

    hs = hs_ref[...]
    ht = ht_ref[...]
    if hs.dtype != jnp.float32:
        hs = hs.astype(jnp.float32)
        ht = ht.astype(jnp.float32)

    # Fused gate pre-activation: XS + XT == hs @ W_xs' + ht @ W_xt' + c_gate.
    # (static sublane-aligned views of the stacked (2D, D) folded weight)
    g = jnp.dot(hs, w_gate_ref[:d, :], preferred_element_type=jnp.float32)
    g += jnp.dot(ht, w_gate_ref[d:, :], preferred_element_type=jnp.float32)
    z = jax.nn.sigmoid(g + c_gate_ref[...])

    # Gate blend: z*hs + (1-z)*ht == ht + z*(hs - ht).
    h = ht + z * (hs - ht)

    # FC_h layer 1 (BN folded) + relu.
    h1 = jnp.dot(h, w_h1_ref[...], preferred_element_type=jnp.float32)
    h1 = jnp.maximum(h1 + c_h1_ref[...], 0.0)

    # FC_h layer 2 (BN folded).
    h2 = jnp.dot(h1, w_h2_ref[...], preferred_element_type=jnp.float32)
    out_ref[...] = (h2 + c_h2_ref[...]).astype(out_ref.dtype)


def gated_fusion(HS, HT, folded, *, tile_m=None):
    """HS, HT: [B, T, N, D] -> [B, T, N, D]."""
    B, T, N, D = HS.shape
    M = B * T * N

    if tile_m is None:
        # Memory-bound kernel: pick the biggest row tile under a ~2 MiB
        # per-buffer budget (6 double-buffered row buffers stay well inside the
        # default scoped-VMEM window) while keeping the grid length >= 2 so the
        # parallel axis can shard across v7x's two TensorCores.
        bytes_per_row = D * 4
        cap = max(8, (2 * 1024 * 1024) // bytes_per_row)
        tile_m = min(cap, pl.cdiv(M, 2))
        tile_m = max(8, ((tile_m + 7) // 8) * 8)   # sublane alignment

    grid_m = pl.cdiv(M, tile_m)
    M_pad = grid_m * tile_m

    hs2 = HS.reshape(M, D)
    ht2 = HT.reshape(M, D)
    if M_pad != M:
        pad = ((0, M_pad - M), (0, 0))
        hs2 = jnp.pad(hs2, pad)
        ht2 = jnp.pad(ht2, pad)

    row_spec = pl.BlockSpec((tile_m, D), lambda i: (i, 0))
    gate_w_spec = pl.BlockSpec((2 * D, D), lambda i: (0, 0))
    mat_spec = pl.BlockSpec((D, D), lambda i: (0, 0))
    vec_spec = pl.BlockSpec((1, D), lambda i: (0, 0))

    out = pl.pallas_call(
        _gated_fusion_kernel,
        out_shape=jax.ShapeDtypeStruct((M_pad, D), HS.dtype),
        grid_spec=pltpu.PrefetchScalarGridSpec(
            num_scalar_prefetch=0,
            grid=(grid_m,),
            in_specs=[
                row_spec, row_spec,          # HS rows, HT rows
                gate_w_spec, vec_spec,       # stacked gate weight + shift
                mat_spec, vec_spec,          # W_h1', c_h1
                mat_spec, vec_spec,          # W_h2', c_h2
            ],
            out_specs=pl.BlockSpec((tile_m, D), lambda i: (i, 0)),
        ),
        compiler_params=pltpu.CompilerParams(
            dimension_semantics=("parallel",)),
    )(
        hs2, ht2,
        folded["w_gate"], folded["c_gate"],
        folded["w_h1"], folded["c_h1"],
        folded["w_h2"], folded["c_h2"],
    )
    if M_pad != M:
        out = out[:M]
    return out.reshape(B, T, N, D)


# ------------------------- host-side parameter folding -------------------------

_EPS = 1e-5


def fold_params(p, eps=_EPS):
    """Fold eval-mode BN affines and conv biases into weights + one shift/layer."""
    def scale_shift(tag):
        s = p[f"bn_{tag}_g"] / jnp.sqrt(p[f"bn_{tag}_v"] + eps)
        sh = p[f"bn_{tag}_b"] - p[f"bn_{tag}_m"] * s
        return s, sh

    s_xs, sh_xs = scale_shift("xs")
    s_xt, sh_xt = scale_shift("xt")
    s_h1, sh_h1 = scale_shift("h1")
    s_h2, sh_h2 = scale_shift("h2")

    w_gate = jnp.concatenate(
        [p["w_xs"] * s_xs[None, :], p["w_xt"] * s_xt[None, :]], axis=0)   # (2D, D)
    c_gate = (sh_xs + p["b_xt"] * s_xt + sh_xt).reshape(1, -1)

    w_h1 = p["w_h1"] * s_h1[None, :]
    c_h1 = (p["b_h1"] * s_h1 + sh_h1).reshape(1, -1)
    w_h2 = p["w_h2"] * s_h2[None, :]
    c_h2 = (p["b_h2"] * s_h2 + sh_h2).reshape(1, -1)

    return {
        "w_gate": w_gate, "c_gate": c_gate,
        "w_h1": w_h1, "c_h1": c_h1,
        "w_h2": w_h2, "c_h2": c_h2,
    }


def make_raw_params(D, key):
    keys = jax.random.split(key, 24)

    def w(k):
        return jax.random.normal(k, (D, D), jnp.float32) * (1.0 / np.sqrt(D))

    def v(k, scale=0.1):
        return jax.random.normal(k, (D,), jnp.float32) * scale

    def bn(tag, k0, k1, k2, k3, d):
        d[f"bn_{tag}_g"] = 1.0 + v(keys[k0])
        d[f"bn_{tag}_b"] = v(keys[k1])
        d[f"bn_{tag}_m"] = v(keys[k2])
        d[f"bn_{tag}_v"] = 1.0 + jnp.abs(v(keys[k3]))
        return d

    p = {}
    p["w_xs"] = w(keys[0])                      # FC_xs: no bias
    p = bn("xs", 1, 2, 3, 4, p)
    p["w_xt"] = w(keys[5])                      # FC_xt: bias
    p["b_xt"] = v(keys[6])
    p = bn("xt", 7, 8, 9, 10, p)
    p["w_h1"] = w(keys[11])                     # FC_h layer 1 (relu)
    p["b_h1"] = v(keys[12])
    p = bn("h1", 13, 14, 15, 16, p)
    p["w_h2"] = w(keys[17])                     # FC_h layer 2 (none)
    p["b_h2"] = v(keys[18])
    p = bn("h2", 19, 20, 21, 22, p)
    return p


def reference(HS, HT, p, eps=_EPS):
    """Unfolded layer-by-layer reference matching the PyTorch module (eval BN)."""
    def bn(x, tag):
        return ((x - p[f"bn_{tag}_m"]) / jnp.sqrt(p[f"bn_{tag}_v"] + eps)
                * p[f"bn_{tag}_g"] + p[f"bn_{tag}_b"])

    xs = bn(HS @ p["w_xs"], "xs")
    xt = bn(HT @ p["w_xt"] + p["b_xt"], "xt")
    z = jax.nn.sigmoid(xs + xt)
    h = z * HS + (1.0 - z) * HT
    h1 = jnp.maximum(bn(h @ p["w_h1"] + p["b_h1"], "h1"), 0.0)
    h2 = bn(h1 @ p["w_h2"] + p["b_h2"], "h2")
    return h2


if __name__ == "__main__":
    B, T, N, D = 2, 8, 16, 32   # batch, num_step, num_vertex, feature dim
    key = jax.random.PRNGKey(0)
    k_hs, k_ht, k_p = jax.random.split(key, 3)
    HS = jax.random.normal(k_hs, (B, T, N, D), jnp.float32)
    HT = jax.random.normal(k_ht, (B, T, N, D), jnp.float32)

    raw = make_raw_params(D, k_p)
    folded = fold_params(raw)

    out = gated_fusion(HS, HT, folded)
    out = jax.block_until_ready(out)

    ref = reference(HS, HT, raw)
    np.testing.assert_allclose(np.asarray(out), np.asarray(ref),
                               rtol=1e-4, atol=1e-4)
    print("KERNEL_OK")
</pallas_src>

<mosaic_0001>
module attributes {stable_mosaic.version = 11 : i64} {
  func.func @_gated_fusion_kernel(%arg0: i32, %arg1: memref<128x32xf32, #tpu.memory_space<vmem>>, %arg2: memref<128x32xf32, #tpu.memory_space<vmem>>, %arg3: memref<64x32xf32, #tpu.memory_space<vmem>>, %arg4: memref<1x32xf32, #tpu.memory_space<vmem>>, %arg5: memref<32x32xf32, #tpu.memory_space<vmem>>, %arg6: memref<1x32xf32, #tpu.memory_space<vmem>>, %arg7: memref<32x32xf32, #tpu.memory_space<vmem>>, %arg8: memref<1x32xf32, #tpu.memory_space<vmem>>, %arg9: memref<128x32xf32, #tpu.memory_space<vmem>>) attributes {dimension_semantics = [#tpu.dimension_semantics<parallel>], iteration_bounds = array<i64: 2>, scalar_prefetch = 0 : i64, scratch_operands = 0 : i64, tpu.core_type = #tpu.core_type<tc>, window_params = [{transform_indices = @transform_0, window_bounds = array<i64: 128, 32>}, {transform_indices = @transform_1, window_bounds = array<i64: 128, 32>}, {pipeline_mode = #tpu.pipeline_mode<synchronous>, transform_indices = @transform_2, window_bounds = array<i64: 64, 32>}, {pipeline_mode = #tpu.pipeline_mode<synchronous>, transform_indices = @transform_3, window_bounds = array<i64: 1, 32>}, {pipeline_mode = #tpu.pipeline_mode<synchronous>, transform_indices = @transform_4, window_bounds = array<i64: 32, 32>}, {pipeline_mode = #tpu.pipeline_mode<synchronous>, transform_indices = @transform_5, window_bounds = array<i64: 1, 32>}, {pipeline_mode = #tpu.pipeline_mode<synchronous>, transform_indices = @transform_6, window_bounds = array<i64: 32, 32>}, {pipeline_mode = #tpu.pipeline_mode<synchronous>, transform_indices = @transform_7, window_bounds = array<i64: 1, 32>}, {transform_indices = @transform_8, window_bounds = array<i64: 128, 32>}]} {
    %c0 = arith.constant 0 : index
    %c0_0 = arith.constant 0 : index
    %0 = vector.load %arg1[%c0, %c0_0] : memref<128x32xf32, #tpu.memory_space<vmem>>, vector<128x32xf32>
    %c0_1 = arith.constant 0 : index
    %c0_2 = arith.constant 0 : index
    %1 = vector.load %arg2[%c0_1, %c0_2] : memref<128x32xf32, #tpu.memory_space<vmem>>, vector<128x32xf32>
    %c0_3 = arith.constant 0 : index
    %c0_4 = arith.constant 0 : index
    %2 = vector.load %arg3[%c0_3, %c0_4] : memref<64x32xf32, #tpu.memory_space<vmem>>, vector<32x32xf32>
    %cst = arith.constant dense<0.000000e+00> : vector<128x32xf32>
    %3 = tpu.matmul %0, %2, %cst {dimension_numbers = #tpu.dot_dimension_numbers<[1], [0], [0], [1], [0, 0, 1, 1], [], []>} : vector<128x32xf32>, vector<32x32xf32>, vector<128x32xf32> -> vector<128x32xf32>
    %c32 = arith.constant 32 : index
    %c0_5 = arith.constant 0 : index
    %4 = vector.load %arg3[%c32, %c0_5] : memref<64x32xf32, #tpu.memory_space<vmem>>, vector<32x32xf32>
    %cst_6 = arith.constant dense<0.000000e+00> : vector<128x32xf32>
    %5 = tpu.matmul %1, %4, %cst_6 {dimension_numbers = #tpu.dot_dimension_numbers<[1], [0], [0], [1], [0, 0, 1, 1], [], []>} : vector<128x32xf32>, vector<32x32xf32>, vector<128x32xf32> -> vector<128x32xf32>
    %6 = arith.addf %3, %5 : vector<128x32xf32>
    %c0_7 = arith.constant 0 : index
    %c0_8 = arith.constant 0 : index
    %7 = vector.load %arg4[%c0_7, %c0_8] : memref<1x32xf32, #tpu.memory_space<vmem>>, vector<1x32xf32>
    %8 = vector.broadcast %7 : vector<1x32xf32> to vector<128x32xf32>
    %9 = arith.addf %6, %8 : vector<128x32xf32>
    %10 = arith.negf %9 : vector<128x32xf32>
    %11 = math.exp %10 : vector<128x32xf32>
    %cst_9 = arith.constant 1.000000e+00 : f32
    %12 = vector.broadcast %cst_9 : f32 to vector<128x32xf32>
    %13 = arith.addf %12, %11 : vector<128x32xf32>
    %14 = arith.divf %12, %13 : vector<128x32xf32>
    %15 = arith.subf %0, %1 : vector<128x32xf32>
    %16 = arith.mulf %14, %15 : vector<128x32xf32>
    %17 = arith.addf %1, %16 : vector<128x32xf32>
    %c0_10 = arith.constant 0 : index
    %c0_11 = arith.constant 0 : index
    %18 = vector.load %arg5[%c0_10, %c0_11] : memref<32x32xf32, #tpu.memory_space<vmem>>, vector<32x32xf32>
    %cst_12 = arith.constant dense<0.000000e+00> : vector<128x32xf32>
    %19 = tpu.matmul %17, %18, %cst_12 {dimension_numbers = #tpu.dot_dimension_numbers<[1], [0], [0], [1], [0, 0, 1, 1], [], []>} : vector<128x32xf32>, vector<32x32xf32>, vector<128x32xf32> -> vector<128x32xf32>
    %c0_13 = arith.constant 0 : index
    %c0_14 = arith.constant 0 : index
    %20 = vector.load %arg6[%c0_13, %c0_14] : memref<1x32xf32, #tpu.memory_space<vmem>>, vector<1x32xf32>
    %21 = vector.broadcast %20 : vector<1x32xf32> to vector<128x32xf32>
    %22 = arith.addf %19, %21 : vector<128x32xf32>
    %cst_15 = arith.constant 0.000000e+00 : f32
    %23 = vector.broadcast %cst_15 : f32 to vector<128x32xf32>
    %24 = arith.maximumf %22, %23 : vector<128x32xf32>
    %c0_16 = arith.constant 0 : index
    %c0_17 = arith.constant 0 : index
    %25 = vector.load %arg7[%c0_16, %c0_17] : memref<32x32xf32, #tpu.memory_space<vmem>>, vector<32x32xf32>
    %cst_18 = arith.constant dense<0.000000e+00> : vector<128x32xf32>
    %26 = tpu.matmul %24, %25, %cst_18 {dimension_numbers = #tpu.dot_dimension_numbers<[1], [0], [0], [1], [0, 0, 1, 1], [], []>} : vector<128x32xf32>, vector<32x32xf32>, vector<128x32xf32> -> vector<128x32xf32>
    %c0_19 = arith.constant 0 : index
    %c0_20 = arith.constant 0 : index
    %27 = vector.load %arg8[%c0_19, %c0_20] : memref<1x32xf32, #tpu.memory_space<vmem>>, vector<1x32xf32>
    %28 = vector.broadcast %27 : vector<1x32xf32> to vector<128x32xf32>
    %29 = arith.addf %26, %28 : vector<128x32xf32>
    %c0_21 = arith.constant 0 : index
    %c0_22 = arith.constant 0 : index
    %30 = vector.load %arg9[%c0_21, %c0_22] : memref<128x32xf32, #tpu.memory_space<vmem>>, vector<128x32xf32>
    tpu.vector_store %arg9[%c0_21, %c0_22], %29 {strides = array<i32>} : memref<128x32xf32, #tpu.memory_space<vmem>>, vector<128x32xf32>,
    return
  }
  func.func @transform_0(%arg0: i32) -> (i32, i32) {
    %c0_i32 = arith.constant 0 : i32
    %c0_i32_0 = arith.constant 0 : i32
    return %arg0, %c0_i32 : i32, i32
  }
  func.func @transform_1(%arg0: i32) -> (i32, i32) {
    %c0_i32 = arith.constant 0 : i32
    %c0_i32_0 = arith.constant 0 : i32
    return %arg0, %c0_i32 : i32, i32
  }
  func.func @transform_2(%arg0: i32) -> (i32, i32) {
    %c0_i32 = arith.constant 0 : i32
    %c0_i32_0 = arith.constant 0 : i32
    %c0_i32_1 = arith.constant 0 : i32
    return %c0_i32, %c0_i32_0 : i32, i32
  }
  func.func @transform_3(%arg0: i32) -> (i32, i32) {
    %c0_i32 = arith.constant 0 : i32
    %c0_i32_0 = arith.constant 0 : i32
    %c0_i32_1 = arith.constant 0 : i32
    return %c0_i32, %c0_i32_0 : i32, i32
  }
  func.func @transform_4(%arg0: i32) -> (i32, i32) {
    %c0_i32 = arith.constant 0 : i32
    %c0_i32_0 = arith.constant 0 : i32
    %c0_i32_1 = arith.constant 0 : i32
    return %c0_i32, %c0_i32_0 : i32, i32
  }
  func.func @transform_5(%arg0: i32) -> (i32, i32) {
    %c0_i32 = arith.constant 0 : i32
    %c0_i32_0 = arith.constant 0 : i32
    %c0_i32_1 = arith.constant 0 : i32
    return %c0_i32, %c0_i32_0 : i32, i32
  }
  func.func @transform_6(%arg0: i32) -> (i32, i32) {
    %c0_i32 = arith.constant 0 : i32
    %c0_i32_0 = arith.constant 0 : i32
    %c0_i32_1 = arith.constant 0 : i32
    return %c0_i32, %c0_i32_0 : i32, i32
  }
  func.func @transform_7(%arg0: i32) -> (i32, i32) {
    %c0_i32 = arith.constant 0 : i32
    %c0_i32_0 = arith.constant 0 : i32
    %c0_i32_1 = arith.constant 0 : i32
    return %c0_i32, %c0_i32_0 : i32, i32
  }
  func.func @transform_8(%arg0: i32) -> (i32, i32) {
    %c0_i32 = arith.constant 0 : i32
    %c0_i32_0 = arith.constant 0 : i32
    return %arg0, %c0_i32 : i32, i32
  }
}

</mosaic_0001>

<llo_original>
// kernel: tpu_custom_call.1
$region0: #{tpu_custom_call.1}
  #allocation0 [shape = 'u32[]', space=smem, size = 0x4, offset = 0x4, fixed_abs, tag = 'smem constant byte address 0x4 - core index']
  #allocation1 [shape = 'u32[144,128]{1,0:T(1,128)}', space=vmem, size = 0x12000, scoped, tag = 'internal scratch']
  %s0 = inlined_call_operand.vmem [shape: f32[256,32], index: 0, kind: input, shape index: {}]
  %s1 = inlined_call_operand.vmem [shape: f32[256,32], index: 1, kind: input, shape index: {}]
  %s2 = inlined_call_operand.vmem [shape: f32[64,32], index: 2, kind: input, shape index: {}]
  %s3 = inlined_call_operand.vmem [shape: f32[1,32], index: 3, kind: input, shape index: {}]
  %s4 = inlined_call_operand.vmem [shape: f32[32,32], index: 4, kind: input, shape index: {}]
  %s5 = inlined_call_operand.vmem [shape: f32[1,32], index: 5, kind: input, shape index: {}]
  %s6 = inlined_call_operand.vmem [shape: f32[32,32], index: 6, kind: input, shape index: {}]
  %s7 = inlined_call_operand.vmem [shape: f32[1,32], index: 7, kind: input, shape index: {}]
  %s8 = inlined_call_operand.vmem [shape: f32[256,32], index: 8, kind: output, shape index: {}]
  %s9 = sld [smem:[#allocation0]]
  $region65: #{tpu_custom_call.1} parent=0
    _
  %s11 = ssub.s32 1, %s9
  %s12 = scalar_select 0, %s11, %s9
  loop: start=0, step=1, limit=4
  $region2: #{tpu_custom_call.1} parent=0 // loop_pre_header
    _
  $region3: #{tpu_custom_call.1} parent=0 // loop_header
    %s14 = sphi 0, %s18
    %p15 = scmp.ge.s32.totalorder %s14, 4
    %s24 = sphi 0, %s26
    %s27 = sphi 0, %s24
    %s28 = sphi 0, %s27
    %s44 = sphi 0, %s28
    %s50 = sphi 0, %s52
    %s53 = sphi 0, %s50
    %s54 = sphi 0, %s53
    %s70 = sphi 0, %s54
    %s74 = sphi 0, %s74
    %s76 = sphi 0, %s74
    %s77 = sphi 0, %s76
    %s91 = sphi 0, %s77
    %s95 = sphi 0, %s95
    %s97 = sphi 0, %s95
    %s98 = sphi 0, %s97
    %s112 = sphi 0, %s98
    %s116 = sphi 0, %s116
    %s118 = sphi 0, %s116
    %s119 = sphi 0, %s118
    %s133 = sphi 0, %s119
    %s137 = sphi 0, %s137
    %s139 = sphi 0, %s137
    %s140 = sphi 0, %s139
    %s154 = sphi 0, %s140
    %s158 = sphi 0, %s158
    %s160 = sphi 0, %s158
    %s161 = sphi 0, %s160
    %s175 = sphi 0, %s161
    %s179 = sphi 0, %s179
    %s181 = sphi 0, %s179
    %s182 = sphi 0, %s181
    %s196 = sphi 0, %s182
    %s202 = sphi 0, %s204
    %s205 = sphi 0, %s202
    %s206 = sphi 0, %s205
    %s222 = sphi 0, %s206
  $region4: #{tpu_custom_call.1} parent=0 // loop_header_branch
    %17 = sbr.rel (%p15) target = $region8
  $region5: #{tpu_custom_call.1} parent=0 // loop_body
    %s19 = ssub.s32 %s14, 1
    %s20 = ssub.s32 %s14, 2
    %s21 = sadd.s32 %s14, 1
    %s22 = ssub.s32 %s14, %s21
    %p23 = scmp.eq.s32.totalorder %s22, 0
    %s25 = sadd.s32 %s24, 1
    %s26 = scalar_select %p23, %s24, %s25
    %p29 = pneg %p23
    %p30 = scmp.eq.s32.totalorder %s14, 1
    %p31 = por %p29, %p30
    %p32 = scmp.ne.s32.totalorder %s24, %s27
    %p33 = scmp.eq.s32.totalorder %s14, 0
    %p34 = por %p32, %p33
    %p35 = scmp.ne.s32.totalorder %s24, %s27
    %p36 = scmp.eq.s32.totalorder %s19, 1
    %p37 = por %p35, %p36
    %p38 = scmp.ne.s32.totalorder %s27, %s28
    %p39 = scmp.eq.s32.totalorder %s19, 0
    %p40 = por %p38, %p39
    %p41 = scmp.ne.s32.totalorder %s27, %s28
    %p42 = scmp.eq.s32.totalorder %s20, 1
    %p43 = por %p41, %p42
    %p45 = scmp.ne.s32.totalorder %s28, %s44
    %p46 = scmp.eq.s32.totalorder %s20, 0
    %p47 = por %p45, %p46
    %s48 = ssub.s32 %s14, %s21
    %p49 = scmp.eq.s32.totalorder %s48, 0
    %s51 = sadd.s32 %s50, 1
    %s52 = scalar_select %p49, %s50, %s51
    %p55 = pneg %p49
    %p56 = scmp.eq.s32.totalorder %s14, 1
    %p57 = por %p55, %p56
    %p58 = scmp.ne.s32.totalorder %s50, %s53
    %p59 = scmp.eq.s32.totalorder %s14, 0
    %p60 = por %p58, %p59
    %p61 = scmp.ne.s32.totalorder %s50, %s53
    %p62 = scmp.eq.s32.totalorder %s19, 1
    %p63 = por %p61, %p62
    %p64 = scmp.ne.s32.totalorder %s53, %s54
    %p65 = scmp.eq.s32.totalorder %s19, 0
    %p66 = por %p64, %p65
    %p67 = scmp.ne.s32.totalorder %s53, %s54
    %p68 = scmp.eq.s32.totalorder %s20, 1
    %p69 = por %p67, %p68
    %p71 = scmp.ne.s32.totalorder %s54, %s70
    %p72 = scmp.eq.s32.totalorder %s20, 0
    %p73 = por %p71, %p72
    %s75 = sadd.s32 %s74, 1
    %p78 = scmp.eq.s32.totalorder %s14, 1
    %p79 = scmp.ne.s32.totalorder %s74, %s76
    %p80 = scmp.eq.s32.totalorder %s14, 0
    %p81 = por %p79, %p80
    %p82 = scmp.ne.s32.totalorder %s74, %s76
    %p83 = scmp.eq.s32.totalorder %s19, 1
    %p84 = por %p82, %p83
    %p85 = scmp.ne.s32.totalorder %s76, %s77
    %p86 = scmp.eq.s32.totalorder %s19, 0
    %p87 = por %p85, %p86
    %p88 = scmp.ne.s32.totalorder %s76, %s77
    %p89 = scmp.eq.s32.totalorder %s20, 1
    %p90 = por %p88, %p89
    %p92 = scmp.ne.s32.totalorder %s77, %s91
    %p93 = scmp.eq.s32.totalorder %s20, 0
    %p94 = por %p92, %p93
    %s96 = sadd.s32 %s95, 1
    %p99 = scmp.eq.s32.totalorder %s14, 1
    %p100 = scmp.ne.s32.totalorder %s95, %s97
    %p101 = scmp.eq.s32.totalorder %s14, 0
    %p102 = por %p100, %p101
    %p103 = scmp.ne.s32.totalorder %s95, %s97
    %p104 = scmp.eq.s32.totalorder %s19, 1
    %p105 = por %p103, %p104
    %p106 = scmp.ne.s32.totalorder %s97, %s98
    %p107 = scmp.eq.s32.totalorder %s19, 0
    %p108 = por %p106, %p107
    %p109 = scmp.ne.s32.totalorder %s97, %s98
    %p110 = scmp.eq.s32.totalorder %s20, 1
    %p111 = por %p109, %p110
    %p113 = scmp.ne.s32.totalorder %s98, %s112
    %p114 = scmp.eq.s32.totalorder %s20, 0
    %p115 = por %p113, %p114
    %s117 = sadd.s32 %s116, 1
    %p120 = scmp.eq.s32.totalorder %s14, 1
    %p121 = scmp.ne.s32.totalorder %s116, %s118
    %p122 = scmp.eq.s32.totalorder %s14, 0
    %p123 = por %p121, %p122
    %p124 = scmp.ne.s32.totalorder %s116, %s118
    %p125 = scmp.eq.s32.totalorder %s19, 1
    %p126 = por %p124, %p125
    %p127 = scmp.ne.s32.totalorder %s118, %s119
    %p128 = scmp.eq.s32.totalorder %s19, 0
    %p129 = por %p127, %p128
    %p130 = scmp.ne.s32.totalorder %s118, %s119
    %p131 = scmp.eq.s32.totalorder %s20, 1
    %p132 = por %p130, %p131
    %p134 = scmp.ne.s32.totalorder %s119, %s133
    %p135 = scmp.eq.s32.totalorder %s20, 0
    %p136 = por %p134, %p135
    %s138 = sadd.s32 %s137, 1
    %p141 = scmp.eq.s32.totalorder %s14, 1
    %p142 = scmp.ne.s32.totalorder %s137, %s139
    %p143 = scmp.eq.s32.totalorder %s14, 0
    %p144 = por %p142, %p143
    %p145 = scmp.ne.s32.totalorder %s137, %s139
    %p146 = scmp.eq.s32.totalorder %s19, 1
    %p147 = por %p145, %p146
    %p148 = scmp.ne.s32.totalorder %s139, %s140
    %p149 = scmp.eq.s32.totalorder %s19, 0
    %p150 = por %p148, %p149
    %p151 = scmp.ne.s32.totalorder %s139, %s140
    %p152 = scmp.eq.s32.totalorder %s20, 1
    %p153 = por %p151, %p152
    %p155 = scmp.ne.s32.totalorder %s140, %s154
    %p156 = scmp.eq.s32.totalorder %s20, 0
    %p157 = por %p155, %p156
    %s159 = sadd.s32 %s158, 1
    %p162 = scmp.eq.s32.totalorder %s14, 1
    %p163 = scmp.ne.s32.totalorder %s158, %s160
    %p164 = scmp.eq.s32.totalorder %s14, 0
    %p165 = por %p163, %p164
    %p166 = scmp.ne.s32.totalorder %s158, %s160
    %p167 = scmp.eq.s32.totalorder %s19, 1
    %p168 = por %p166, %p167
    %p169 = scmp.ne.s32.totalorder %s160, %s161
    %p170 = scmp.eq.s32.totalorder %s19, 0
    %p171 = por %p169, %p170
    %p172 = scmp.ne.s32.totalorder %s160, %s161
    %p173 = scmp.eq.s32.totalorder %s20, 1
    %p174 = por %p172, %p173
    %p176 = scmp.ne.s32.totalorder %s161, %s175
    %p177 = scmp.eq.s32.totalorder %s20, 0
    %p178 = por %p176, %p177
    %s180 = sadd.s32 %s179, 1
    %p183 = scmp.eq.s32.totalorder %s14, 1
    %p184 = scmp.ne.s32.totalorder %s179, %s181
    %p185 = scmp.eq.s32.totalorder %s14, 0
    %p186 = por %p184, %p185
    %p187 = scmp.ne.s32.totalorder %s179, %s181
    %p188 = scmp.eq.s32.totalorder %s19, 1
    %p189 = por %p187, %p188
    %p190 = scmp.ne.s32.totalorder %s181, %s182
    %p191 = scmp.eq.s32.totalorder %s19, 0
    %p192 = por %p190, %p191
    %p193 = scmp.ne.s32.totalorder %s181, %s182
    %p194 = scmp.eq.s32.totalorder %s20, 1
    %p195 = por %p193, %p194
    %p197 = scmp.ne.s32.totalorder %s182, %s196
    %p198 = scmp.eq.s32.totalorder %s20, 0
    %p199 = por %p197, %p198
    %s200 = ssub.s32 %s14, %s21
    %p201 = scmp.eq.s32.totalorder %s200, 0
    %s203 = sadd.s32 %s202, 1
    %s204 = scalar_select %p201, %s202, %s203
    %p207 = pneg %p201
    %p208 = scmp.eq.s32.totalorder %s14, 1
    %p209 = por %p207, %p208
    %p210 = scmp.ne.s32.totalorder %s202, %s205
    %p211 = scmp.eq.s32.totalorder %s14, 0
    %p212 = por %p210, %p211
    %p213 = scmp.ne.s32.totalorder %s202, %s205
    %p214 = scmp.eq.s32.totalorder %s19, 1
    %p215 = por %p213, %p214
    %p216 = scmp.ne.s32.totalorder %s205, %s206
    %p217 = scmp.eq.s32.totalorder %s19, 0
    %p218 = por %p216, %p217
    %p219 = scmp.ne.s32.totalorder %s205, %s206
    %p220 = scmp.eq.s32.totalorder %s20, 1
    %p221 = por %p219, %p220
    %p223 = scmp.ne.s32.totalorder %s206, %s222
    %p224 = scmp.eq.s32.totalorder %s20, 0
    %p225 = por %p223, %p224
    %p226 = scmp.le.s32.totalorder 1, %s14
    %p227 = scmp.lt.s32.totalorder %s14, 3
    %p228 = pnand %p226, %p227
    %p229 = pneg %p228
    // Predicated region
    $region9: #{tpu_custom_call.1} parent=5 // pred_check
      _
    $region10: #{tpu_custom_call.1} parent=5 // pred_check_branch
      %231 = sbr.rel (%p228) target = $region12
    $region11: #{tpu_custom_call.1} parent=5 // pred_region
      %s232 = ssub.s32 %s14, 1
      // Predicated region
      $region13: #{tpu_custom_call.1} parent=11 // pred_check
        %p233 = pneg %p87
      $region14: #{tpu_custom_call.1} parent=11 // pred_check_branch
        %235 = sbr.rel (%p233) target = $region16
      $region15: #{tpu_custom_call.1} parent=11 // pred_region
        _
      $region16: #{tpu_custom_call.1} parent=11 // pred_fallthru
        _
      // Predicated region
      $region17: #{tpu_custom_call.1} parent=11 // pred_check
        %p236 = pneg %p108
      $region18: #{tpu_custom_call.1} parent=11 // pred_check_branch
        %238 = sbr.rel (%p236) target = $region20
      $region19: #{tpu_custom_call.1} parent=11 // pred_region
        _
      $region20: #{tpu_custom_call.1} parent=11 // pred_fallthru
        _
      // Predicated region
      $region21: #{tpu_custom_call.1} parent=11 // pred_check
        %p239 = pneg %p129
      $region22: #{tpu_custom_call.1} parent=11 // pred_check_branch
        %241 = sbr.rel (%p239) target = $region24
      $region23: #{tpu_custom_call.1} parent=11 // pred_region
        _
      $region24: #{tpu_custom_call.1} parent=11 // pred_fallthru
        _
      // Predicated region
      $region25: #{tpu_custom_call.1} parent=11 // pred_check
        %p242 = pneg %p150
      $region26: #{tpu_custom_call.1} parent=11 // pred_check_branch
        %244 = sbr.rel (%p242) target = $region28
      $region27: #{tpu_custom_call.1} parent=11 // pred_region
        _
      $region28: #{tpu_custom_call.1} parent=11 // pred_fallthru
        _
      // Predicated region
      $region29: #{tpu_custom_call.1} parent=11 // pred_check
        %p245 = pneg %p171
      $region30: #{tpu_custom_call.1} parent=11 // pred_check_branch
        %247 = sbr.rel (%p245) target = $region32
      $region31: #{tpu_custom_call.1} parent=11 // pred_region
        _
      $region32: #{tpu_custom_call.1} parent=11 // pred_fallthru
        _
      // Predicated region
      $region33: #{tpu_custom_call.1} parent=11 // pred_check
        %p248 = pneg %p192
      $region34: #{tpu_custom_call.1} parent=11 // pred_check_branch
        %250 = sbr.rel (%p248) target = $region36
      $region35: #{tpu_custom_call.1} parent=11 // pred_region
        _
      $region36: #{tpu_custom_call.1} parent=11 // pred_fallthru
        _
    $region12: #{tpu_custom_call.1} parent=5 // pred_fallthru
      _
    %p251 = scmp.lt.s32.totalorder %s14, 2
    // Predicated region
    $region37: #{tpu_custom_call.1} parent=5 // pred_check
      %p252 = pneg %p251
    $region38: #{tpu_custom_call.1} parent=5 // pred_check_branch
      %254 = sbr.rel (%p252) target = $region40
    $region39: #{tpu_custom_call.1} parent=5 // pred_region
      // Predicated region
      $region41: #{tpu_custom_call.1} parent=39 // pred_check
        %p255 = pneg %p34
      $region42: #{tpu_custom_call.1} parent=39 // pred_check_branch
        %257 = sbr.rel (%p255) target = $region44
      $region43: #{tpu_custom_call.1} parent=39 // pred_region
        %s258 = smul.u32 16, %s14
        %p259 = scmp.lt.s32.totalorder %s258, 31
        %s260 = scalar_select %p259, %s258, 31
        %s261 = smul.addr %s260, 8
        %s262 = scalar_lea.vmem %s0, %s261
        %s263 = smul.u32 16, %s14
      $region44: #{tpu_custom_call.1} parent=39 // pred_fallthru
        _
      // Predicated region
      $region45: #{tpu_custom_call.1} parent=39 // pred_check
        %p264 = pneg %p60
      $region46: #{tpu_custom_call.1} parent=39 // pred_check_branch
        %266 = sbr.rel (%p264) target = $region48
      $region47: #{tpu_custom_call.1} parent=39 // pred_region
        %s267 = smul.u32 16, %s14
        %p268 = scmp.lt.s32.totalorder %s267, 31
        %s269 = scalar_select %p268, %s267, 31
        %s270 = smul.addr %s269, 8
        %s271 = scalar_lea.vmem %s1, %s270
        %s272 = smul.u32 16, %s14
      $region48: #{tpu_custom_call.1} parent=39 // pred_fallthru
        _
    $region40: #{tpu_custom_call.1} parent=5 // pred_fallthru
      _
    %p273 = scmp.le.s32.totalorder 1, %s14
    %p274 = scmp.lt.s32.totalorder %s14, 3
    %p275 = pnand %p273, %p274
    %p276 = pneg %p275
    // Predicated region
    $region49: #{tpu_custom_call.1} parent=5 // pred_check
      _
    $region50: #{tpu_custom_call.1} parent=5 // pred_check_branch
      %278 = sbr.rel (%p275) target = $region52
    $region51: #{tpu_custom_call.1} parent=5 // pred_region
      %s279 = ssub.s32 %s14, 1
      %s280 = smul.u32 16, %s19
      %p281 = scmp.lt.s32.totalorder %s280, 31
      %s282 = scalar_select %p281, %s280, 31
      %s283 = smul.addr %s282, 8
      %s284 = scalar_lea.vmem %s0, %s283
      %p285 = pneg %p40
      %p286 = pneg %p37
      %s287 = smul.u32 16, %s19
      %p288 = scmp.lt.s32.totalorder %s287, 31
      %s289 = scalar_select %p288, %s287, 31
      %s290 = smul.addr %s289, 8
      %s291 = scalar_lea.vmem %s1, %s290
      %p292 = pneg %p66
      %p293 = pneg %p63
      %p294 = pneg %p87
      %p295 = pneg %p84
      %p296 = pneg %p108
      %p297 = pneg %p105
      %p298 = pneg %p129
      %p299 = pneg %p126
      %p300 = pneg %p150
      %p301 = pneg %p147
      %p302 = pneg %p171
      %p303 = pneg %p168
      %p304 = pneg %p192
      %p305 = pneg %p189
      %p306 = pneg %p218
      %p307 = pneg %p215
      %s308 = smul.u32 16, %s19
      %p309 = scmp.lt.s32.totalorder %s308, 31
      %s310 = scalar_select %p309, %s308, 31
      %s311 = smul.addr %s310, 8
      %s312 = scalar_lea.vmem %s8, %s311
      %s313 = smul.u32 16, %s19
      %p314 = scmp.lt.s32.totalorder %s313, 31
      %s315 = scalar_select %p314, %s313, 31
      %s316 = smul.addr %s315, 8
      %s317 = scalar_lea.vmem %s0, %s316
      %s318 = smul.u32 16, %s19
      %s319 = smul.u32 16, %s19
      %p320 = scmp.lt.s32.totalorder %s319, 31
      %s321 = scalar_select %p320, %s319, 31
      %s322 = smul.addr %s321, 8
      %s323 = scalar_lea.vmem %s1, %s322
      %s324 = smul.u32 16, %s19
      %s325 = smul.u32 16, %s19
      %p326 = scmp.lt.s32.totalorder %s325, 31
      %s327 = scalar_select %p326, %s325, 31
      %s328 = smul.addr %s327, 8
      %s329 = scalar_lea.vmem %s8, %s328
      %s330 = smul.u32 16, %s19
      %v331 = vld [vmem:[%s317] sm:$0xff]
      %v332 = vld [vmem:[%s317 + $0x8] sm:$0xff]
      %v333 = vld [vmem:[%s317 + $0x10] sm:$0xff]
      %v334 = vld [vmem:[%s317 + $0x18] sm:$0xff]
      %v335 = vld [vmem:[%s317 + $0x20] sm:$0xff]
      %v336 = vld [vmem:[%s317 + $0x28] sm:$0xff]
      %v337 = vld [vmem:[%s317 + $0x30] sm:$0xff]
      %v338 = vld [vmem:[%s317 + $0x38] sm:$0xff]
      %v339 = vld [vmem:[%s317 + $0x40] sm:$0xff]
      %v340 = vld [vmem:[%s317 + $0x48] sm:$0xff]
      %v341 = vld [vmem:[%s317 + $0x50] sm:$0xff]
      %v342 = vld [vmem:[%s317 + $0x58] sm:$0xff]
      %v343 = vld [vmem:[%s317 + $0x60] sm:$0xff]
      %v344 = vld [vmem:[%s317 + $0x68] sm:$0xff]
      %v345 = vld [vmem:[%s317 + $0x70] sm:$0xff]
      %v346 = vld [vmem:[%s317 + $0x78] sm:$0xff]
      %v347 = vld [vmem:[%s323] sm:$0xff]
      %v348 = vld [vmem:[%s323 + $0x8] sm:$0xff]
      %v349 = vld [vmem:[%s323 + $0x10] sm:$0xff]
      %v350 = vld [vmem:[%s323 + $0x18] sm:$0xff]
      %v351 = vld [vmem:[%s323 + $0x20] sm:$0xff]
      %v352 = vld [vmem:[%s323 + $0x28] sm:$0xff]
      %v353 = vld [vmem:[%s323 + $0x30] sm:$0xff]
      %v354 = vld [vmem:[%s323 + $0x38] sm:$0xff]
      %v355 = vld [vmem:[%s323 + $0x40] sm:$0xff]
      %v356 = vld [vmem:[%s323 + $0x48] sm:$0xff]
      %v357 = vld [vmem:[%s323 + $0x50] sm:$0xff]
      %v358 = vld [vmem:[%s323 + $0x58] sm:$0xff]
      %v359 = vld [vmem:[%s323 + $0x60] sm:$0xff]
      %v360 = vld [vmem:[%s323 + $0x68] sm:$0xff]
      %v361 = vld [vmem:[%s323 + $0x70] sm:$0xff]
      %v362 = vld [vmem:[%s323 + $0x78] sm:$0xff]
      %v363 = vld [vmem:[%s2] sm:$0xff]
      %v364 = vld [vmem:[%s2 + $0x8] sm:$0xff]
      %v365 = vld [vmem:[%s2 + $0x10] sm:$0xff]
      %v366 = vld [vmem:[%s2 + $0x18] sm:$0xff]
      %v367 = vld [vmem:[%s2 + $0x20] sm:$0xff]
      %v368 = vld [vmem:[%s2 + $0x28] sm:$0xff]
      %v369 = vld [vmem:[%s2 + $0x30] sm:$0xff]
      %v370 = vld [vmem:[%s2 + $0x38] sm:$0xff]
      %vm371 = vcmask 261120
      %v373 = vsel %vm371, %v347, 0
      %v376 = vsel %vm371, %v348, 0
      %v379 = vsel %vm371, %v349, 0
      %v382 = vsel %vm371, %v350, 0
      %v385 = vsel %vm371, %v351, 0
      %v388 = vsel %vm371, %v352, 0
      %v391 = vsel %vm371, %v353, 0
      %v394 = vsel %vm371, %v354, 0
      %v397 = vsel %vm371, %v355, 0
      %v400 = vsel %vm371, %v356, 0
      %v403 = vsel %vm371, %v357, 0
      %v406 = vsel %vm371, %v358, 0
      %v409 = vsel %vm371, %v359, 0
      %v412 = vsel %vm371, %v360, 0
      %v415 = vsel %vm371, %v361, 0
      %v418 = vsel %vm371, %v362, 0
      %420 = vmatprep.subr.mxu0 0.0
      %421 = vmatpush1.msra.mxu0 0.0
      %422 = vmatprep.subr.mxu0 0.0
      %423 = vmatpush1.msra.mxu0 0.0
      %424 = vmatprep.subr.mxu0 0.0
      %425 = vmatpush1.msra.mxu0 0.0
      %426 = vmatprep.subr.mxu0 0.0
      %427 = vmatpush1.msra.mxu0 0.0
      %428 = vmatprep.subr.mxu0 0.0
      %429 = vmatpush1.msra.mxu0 0.0
      %430 = vmatprep.subr.mxu0 0.0
      %431 = vmatpush1.msra.mxu0 0.0
      %432 = vmatprep.subr.mxu0 0.0
      %433 = vmatpush1.msra.mxu0 0.0
      %434 = vmatprep.subr.mxu0 0.0
      %435 = vmatpush1.msra.mxu0 0.0
      %436 = vmatprep.subr.mxu0 0.0
      %437 = vmatpush1.msra.mxu0 0.0
      %438 = vmatprep.subr.mxu0 0.0
      %439 = vmatpush1.msra.mxu0 0.0
      %440 = vmatprep.subr.mxu0 0.0
      %441 = vmatpush1.msra.mxu0 0.0
      %442 = vmatprep.subr.mxu0 0.0
      %443 = vmatpush1.msra.mxu0 0.0
      %444 = vmatprep.subr.mxu0 0.0
      %445 = vmatpush1.msra.mxu0 %v370
      %446 = vmatprep.subr.mxu0 0.0
      %447 = vmatpush1.msra.mxu0 %v369
      %448 = vmatprep.subr.mxu0 0.0
      %449 = vmatpush1.msra.mxu0 %v368
      %450 = vmatprep.subr.mxu0 0.0
      %451 = vmatpush1.msra.mxu0 %v367
      %452 = vmatprep.subr.mxu0 0.0
      %453 = vmatpush2.msra.mxu0 0.0
      %454 = vmatprep.subr.mxu0 0.0
      %455 = vmatpush2.msra.mxu0 0.0
      %456 = vmatprep.subr.mxu0 0.0
      %457 = vmatpush2.msra.mxu0 0.0
      %458 = vmatprep.subr.mxu0 0.0
      %459 = vmatpush2.msra.mxu0 0.0
      %460 = vmatprep.subr.mxu0 0.0
      %461 = vmatpush2.msra.mxu0 0.0
      %462 = vmatprep.subr.mxu0 0.0
      %463 = vmatpush2.msra.mxu0 0.0
      %464 = vmatprep.subr.mxu0 0.0
      %465 = vmatpush2.msra.mxu0 0.0
      %466 = vmatprep.subr.mxu0 0.0
      %467 = vmatpush2.msra.mxu0 0.0
      %468 = vmatprep.subr.mxu0 0.0
      %469 = vmatpush2.msra.mxu0 0.0
      %470 = vmatprep.subr.mxu0 0.0
      %471 = vmatpush2.msra.mxu0 0.0
      %472 = vmatprep.subr.mxu0 0.0
      %473 = vmatpush2.msra.mxu0 0.0
      %474 = vmatprep.subr.mxu0 0.0
      %475 = vmatpush2.msra.mxu0 0.0
      %476 = vmatprep.subr.mxu0 0.0
      %477 = vmatpush2.msra.mxu0 0.0
      %478 = vmatprep.subr.mxu0 0.0
      %479 = vmatpush2.msra.mxu0 0.0
      %480 = vmatprep.subr.mxu0 0.0
      %481 = vmatpush2.msra.mxu0 0.0
      %482 = vmatprep.subr.mxu0 0.0
      %483 = vmatpush2.msra.mxu0 0.0
      %484 = vmatprep.mubr.f32.mxu0 0.0
      %485 = vmatmul.mubr.f32.gmra.mxu0 %v373
      %v486 = vpop.f32.mrf.mxu0
      %v487 = vadd.f32 0.0, %v486
      %v488 = vpop.f32.mrf.mxu0
      %489 = vmatprep.mubr.f32.mxu0 0.0
      %490 = vmatmul.mubr.f32.gmra.mxu0 %v376
      %v491 = vpop.f32.mrf.mxu0
      %v492 = vadd.f32 0.0, %v491
      %v493 = vpop.f32.mrf.mxu0
      %494 = vmatprep.mubr.f32.mxu0 0.0
      %495 = vmatmul.mubr.f32.gmra.mxu0 %v379
      %v496 = vpop.f32.mrf.mxu0
      %v497 = vadd.f32 0.0, %v496
      %v498 = vpop.f32.mrf.mxu0
      %499 = vmatprep.mubr.f32.mxu0 0.0
      %500 = vmatmul.mubr.f32.gmra.mxu0 %v382
      %v501 = vpop.f32.mrf.mxu0
      %v502 = vadd.f32 0.0, %v501
      %v503 = vpop.f32.mrf.mxu0
      %504 = vmatprep.mubr.f32.mxu0 0.0
      %505 = vmatmul.mubr.f32.gmra.mxu0 %v385
      %v506 = vpop.f32.mrf.mxu0
      %v507 = vadd.f32 0.0, %v506
      %v508 = vpop.f32.mrf.mxu0
      %509 = vmatprep.mubr.f32.mxu0 0.0
      %510 = vmatmul.mubr.f32.gmra.mxu0 %v388
      %v511 = vpop.f32.mrf.mxu0
      %v512 = vadd.f32 0.0, %v511
      %v513 = vpop.f32.mrf.mxu0
      %514 = vmatprep.mubr.f32.mxu0 0.0
      %515 = vmatmul.mubr.f32.gmra.mxu0 %v391
      %v516 = vpop.f32.mrf.mxu0
      %v517 = vadd.f32 0.0, %v516
      %v518 = vpop.f32.mrf.mxu0
      %519 = vmatprep.mubr.f32.mxu0 0.0
      %520 = vmatmul.mubr.f32.gmra.mxu0 %v394
      %v521 = vpop.f32.mrf.mxu0
      %v522 = vadd.f32 0.0, %v521
      %v523 = vpop.f32.mrf.mxu0
      %524 = vmatprep.mubr.f32.mxu0 0.0
      %525 = vmatmul.mubr.f32.gmra.mxu0 %v397
      %v526 = vpop.f32.mrf.mxu0
      %v527 = vadd.f32 0.0, %v526
      %v528 = vpop.f32.mrf.mxu0
      %529 = vmatprep.mubr.f32.mxu0 0.0
      %530 = vmatmul.mubr.f32.gmra.mxu0 %v400
      %v531 = vpop.f32.mrf.mxu0
      %v532 = vadd.f32 0.0, %v531
      %v533 = vpop.f32.mrf.mxu0
      %534 = vmatprep.mubr.f32.mxu0 0.0
      %535 = vmatmul.mubr.f32.gmra.mxu0 %v403
      %v536 = vpop.f32.mrf.mxu0
      %v537 = vadd.f32 0.0, %v536
      %v538 = vpop.f32.mrf.mxu0
      %539 = vmatprep.mubr.f32.mxu0 0.0
      %540 = vmatmul.mubr.f32.gmra.mxu0 %v406
      %v541 = vpop.f32.mrf.mxu0
      %v542 = vadd.f32 0.0, %v541
      %v543 = vpop.f32.mrf.mxu0
      %544 = vmatprep.mubr.f32.mxu0 0.0
      %545 = vmatmul.mubr.f32.gmra.mxu0 %v409
      %v546 = vpop.f32.mrf.mxu0
      %v547 = vadd.f32 0.0, %v546
      %v548 = vpop.f32.mrf.mxu0
      %549 = vmatprep.mubr.f32.mxu0 0.0
      %550 = vmatmul.mubr.f32.gmra.mxu0 %v412
      %v551 = vpop.f32.mrf.mxu0
      %v552 = vadd.f32 0.0, %v551
      %v553 = vpop.f32.mrf.mxu0
      %554 = vmatprep.mubr.f32.mxu0 0.0
      %555 = vmatmul.mubr.f32.gmra.mxu0 %v415
      %v556 = vpop.f32.mrf.mxu0
      %v557 = vadd.f32 0.0, %v556
      %v558 = vpop.f32.mrf.mxu0
      %559 = vmatprep.mubr.f32.mxu0 0.0
      %560 = vmatmul.mubr.f32.gmra.mxu0 %v418
      %v561 = vpop.f32.mrf.mxu0
      %v562 = vadd.f32 0.0, %v561
      %v563 = vpop.f32.mrf.mxu0
      %564 = vdwg.mxu0
      %v566 = vsel %vm371, %v331, 0
      %v569 = vsel %vm371, %v332, 0
      %v572 = vsel %vm371, %v333, 0
      %v575 = vsel %vm371, %v334, 0
      %v578 = vsel %vm371, %v335, 0
      %v581 = vsel %vm371, %v336, 0
      %v584 = vsel %vm371, %v337, 0
      %v587 = vsel %vm371, %v338, 0
      %v590 = vsel %vm371, %v339, 0
      %v593 = vsel %vm371, %v340, 0
      %v596 = vsel %vm371, %v341, 0
      %v599 = vsel %vm371, %v342, 0
      %v602 = vsel %vm371, %v343, 0
      %v605 = vsel %vm371, %v344, 0
      %v608 = vsel %vm371, %v345, 0
      %v611 = vsel %vm371, %v346, 0
      %613 = vmatprep.subr.mxu0 0.0
      %614 = vmatpush1.msra.mxu0 0.0
      %615 = vmatprep.subr.mxu0 0.0
      %616 = vmatpush1.msra.mxu0 0.0
      %617 = vmatprep.subr.mxu0 0.0
      %618 = vmatpush1.msra.mxu0 0.0
      %619 = vmatprep.subr.mxu0 0.0
      %620 = vmatpush1.msra.mxu0 0.0
      %621 = vmatprep.subr.mxu0 0.0
      %622 = vmatpush1.msra.mxu0 0.0
      %623 = vmatprep.subr.mxu0 0.0
      %624 = vmatpush1.msra.mxu0 0.0
      %625 = vmatprep.subr.mxu0 0.0
      %626 = vmatpush1.msra.mxu0 0.0
      %627 = vmatprep.subr.mxu0 0.0
      %628 = vmatpush1.msra.mxu0 0.0
      %629 = vmatprep.subr.mxu0 0.0
      %630 = vmatpush1.msra.mxu0 0.0
      %631 = vmatprep.subr.mxu0 0.0
      %632 = vmatpush1.msra.mxu0 0.0
      %633 = vmatprep.subr.mxu0 0.0
      %634 = vmatpush1.msra.mxu0 0.0
      %635 = vmatprep.subr.mxu0 0.0
      %636 = vmatpush1.msra.mxu0 0.0
      %637 = vmatprep.subr.mxu0 0.0
      %638 = vmatpush1.msra.mxu0 %v366
      %639 = vmatprep.subr.mxu0 0.0
      %640 = vmatpush1.msra.mxu0 %v365
      %641 = vmatprep.subr.mxu0 0.0
      %642 = vmatpush1.msra.mxu0 %v364
      %643 = vmatprep.subr.mxu0 0.0
      %644 = vmatpush1.msra.mxu0 %v363
      %645 = vmatprep.subr.mxu0 0.0
      %646 = vmatpush2.msra.mxu0 0.0
      %647 = vmatprep.subr.mxu0 0.0
      %648 = vmatpush2.msra.mxu0 0.0
      %649 = vmatprep.subr.mxu0 0.0
      %650 = vmatpush2.msra.mxu0 0.0
      %651 = vmatprep.subr.mxu0 0.0
      %652 = vmatpush2.msra.mxu0 0.0
      %653 = vmatprep.subr.mxu0 0.0
      %654 = vmatpush2.msra.mxu0 0.0
      %655 = vmatprep.subr.mxu0 0.0
      %656 = vmatpush2.msra.mxu0 0.0
      %657 = vmatprep.subr.mxu0 0.0
      %658 = vmatpush2.msra.mxu0 0.0
      %659 = vmatprep.subr.mxu0 0.0
      %660 = vmatpush2.msra.mxu0 0.0
      %661 = vmatprep.subr.mxu0 0.0
      %662 = vmatpush2.msra.mxu0 0.0
      %663 = vmatprep.subr.mxu0 0.0
      %664 = vmatpush2.msra.mxu0 0.0
      %665 = vmatprep.subr.mxu0 0.0
      %666 = vmatpush2.msra.mxu0 0.0
      %667 = vmatprep.subr.mxu0 0.0
      %668 = vmatpush2.msra.mxu0 0.0
      %669 = vmatprep.subr.mxu0 0.0
      %670 = vmatpush2.msra.mxu0 0.0
      %671 = vmatprep.subr.mxu0 0.0
      %672 = vmatpush2.msra.mxu0 0.0
      %673 = vmatprep.subr.mxu0 0.0
      %674 = vmatpush2.msra.mxu0 0.0
      %675 = vmatprep.subr.mxu0 0.0
      %676 = vmatpush2.msra.mxu0 0.0
      %677 = vmatprep.mubr.f32.mxu0 0.0
      %678 = vmatmul.mubr.f32.gmra.mxu0 %v566
      %v679 = vpop.f32.mrf.mxu0
      %v680 = vadd.f32 %v487, %v679
      %v681 = vpop.f32.mrf.mxu0
      %682 = vmatprep.mubr.f32.mxu0 0.0
      %683 = vmatmul.mubr.f32.gmra.mxu0 %v569
      %v684 = vpop.f32.mrf.mxu0
      %v685 = vadd.f32 %v492, %v684
      %v686 = vpop.f32.mrf.mxu0
      %687 = vmatprep.mubr.f32.mxu0 0.0
      %688 = vmatmul.mubr.f32.gmra.mxu0 %v572
      %v689 = vpop.f32.mrf.mxu0
      %v690 = vadd.f32 %v497, %v689
      %v691 = vpop.f32.mrf.mxu0
      %692 = vmatprep.mubr.f32.mxu0 0.0
      %693 = vmatmul.mubr.f32.gmra.mxu0 %v575
      %v694 = vpop.f32.mrf.mxu0
      %v695 = vadd.f32 %v502, %v694
      %v696 = vpop.f32.mrf.mxu0
      %697 = vmatprep.mubr.f32.mxu0 0.0
      %698 = vmatmul.mubr.f32.gmra.mxu0 %v578
      %v699 = vpop.f32.mrf.mxu0
      %v700 = vadd.f32 %v507, %v699
      %v701 = vpop.f32.mrf.mxu0
      %702 = vmatprep.mubr.f32.mxu0 0.0
      %703 = vmatmul.mubr.f32.gmra.mxu0 %v581
      %v704 = vpop.f32.mrf.mxu0
      %v705 = vadd.f32 %v512, %v704
      %v706 = vpop.f32.mrf.mxu0
      %707 = vmatprep.mubr.f32.mxu0 0.0
      %708 = vmatmul.mubr.f32.gmra.mxu0 %v584
      %v709 = vpop.f32.mrf.mxu0
      %v710 = vadd.f32 %v517, %v709
      %v711 = vpop.f32.mrf.mxu0
      %712 = vmatprep.mubr.f32.mxu0 0.0
      %713 = vmatmul.mubr.f32.gmra.mxu0 %v587
      %v714 = vpop.f32.mrf.mxu0
      %v715 = vadd.f32 %v522, %v714
      %v716 = vpop.f32.mrf.mxu0
      %717 = vmatprep.mubr.f32.mxu0 0.0
      %718 = vmatmul.mubr.f32.gmra.mxu0 %v590
      %v719 = vpop.f32.mrf.mxu0
      %v720 = vadd.f32 %v527, %v719
      %v721 = vpop.f32.mrf.mxu0
      %722 = vmatprep.mubr.f32.mxu0 0.0
      %723 = vmatmul.mubr.f32.gmra.mxu0 %v593
      %v724 = vpop.f32.mrf.mxu0
      %v725 = vadd.f32 %v532, %v724
      %v726 = vpop.f32.mrf.mxu0
      %727 = vmatprep.mubr.f32.mxu0 0.0
      %728 = vmatmul.mubr.f32.gmra.mxu0 %v596
      %v729 = vpop.f32.mrf.mxu0
      %v730 = vadd.f32 %v537, %v729
      %v731 = vpop.f32.mrf.mxu0
      %732 = vmatprep.mubr.f32.mxu0 0.0
      %733 = vmatmul.mubr.f32.gmra.mxu0 %v599
      %v734 = vpop.f32.mrf.mxu0
      %v735 = vadd.f32 %v542, %v734
      %v736 = vpop.f32.mrf.mxu0
      %737 = vmatprep.mubr.f32.mxu0 0.0
      %738 = vmatmul.mubr.f32.gmra.mxu0 %v602
      %v739 = vpop.f32.mrf.mxu0
      %v740 = vadd.f32 %v547, %v739
      %v741 = vpop.f32.mrf.mxu0
      %742 = vmatprep.mubr.f32.mxu0 0.0
      %743 = vmatmul.mubr.f32.gmra.mxu0 %v605
      %v744 = vpop.f32.mrf.mxu0
      %v745 = vadd.f32 %v552, %v744
      %v746 = vpop.f32.mrf.mxu0
      %747 = vmatprep.mubr.f32.mxu0 0.0
      %748 = vmatmul.mubr.f32.gmra.mxu0 %v608
      %v749 = vpop.f32.mrf.mxu0
      %v750 = vadd.f32 %v557, %v749
      %v751 = vpop.f32.mrf.mxu0
      %752 = vmatprep.mubr.f32.mxu0 0.0
      %753 = vmatmul.mubr.f32.gmra.mxu0 %v611
      %v754 = vpop.f32.mrf.mxu0
      %v755 = vadd.f32 %v562, %v754
      %v756 = vpop.f32.mrf.mxu0
      %757 = vdwg.mxu0
      %v758 = vld [vmem:[%s3] sm:$0x1]
      %v760 = vlaneseq
      %v761 = vshrl.u32 %v760, 7
      %v762 = vsub.s32 0, %v761
      %v763 = vrot.slane %v758, %v762
      %v765 = vadd.f32 %v680, %v763
      %v766 = vadd.f32 %v685, %v763
      %v767 = vadd.f32 %v690, %v763
      %v768 = vadd.f32 %v695, %v763
      %v769 = vadd.f32 %v700, %v763
      %v770 = vadd.f32 %v705, %v763
      %v771 = vadd.f32 %v710, %v763
      %v772 = vadd.f32 %v715, %v763
      %v773 = vadd.f32 %v720, %v763
      %v774 = vadd.f32 %v725, %v763
      %v775 = vadd.f32 %v730, %v763
      %v776 = vadd.f32 %v735, %v763
      %v777 = vadd.f32 %v740, %v763
      %v778 = vadd.f32 %v745, %v763
      %v779 = vadd.f32 %v750, %v763
      %v780 = vadd.f32 %v755, %v763
      %v781 = vxor.u32 %v765, 2147483648
      %v782 = vxor.u32 %v766, 2147483648
      %v783 = vxor.u32 %v767, 2147483648
      %v784 = vxor.u32 %v768, 2147483648
      %v785 = vxor.u32 %v769, 2147483648
      %v786 = vxor.u32 %v770, 2147483648
      %v787 = vxor.u32 %v771, 2147483648
      %v788 = vxor.u32 %v772, 2147483648
      %v789 = vxor.u32 %v773, 2147483648
      %v790 = vxor.u32 %v774, 2147483648
      %v791 = vxor.u32 %v775, 2147483648
      %v792 = vxor.u32 %v776, 2147483648
      %v793 = vxor.u32 %v777, 2147483648
      %v794 = vxor.u32 %v778, 2147483648
      %v795 = vxor.u32 %v779, 2147483648
      %v796 = vxor.u32 %v780, 2147483648
      %v797 = vmul.f32 %v781, 1.442695
      %v798 = vpow.pop %v797
      %v799 = vmul.f32 %v782, 1.442695
      %v800 = vpow.pop %v799
      %v801 = vmul.f32 %v783, 1.442695
      %v802 = vpow.pop %v801
      %v803 = vmul.f32 %v784, 1.442695
      %v804 = vpow.pop %v803
      %v805 = vmul.f32 %v785, 1.442695
      %v806 = vpow.pop %v805
      %v807 = vmul.f32 %v786, 1.442695
      %v808 = vpow.pop %v807
      %v809 = vmul.f32 %v787, 1.442695
      %v810 = vpow.pop %v809
      %v811 = vmul.f32 %v788, 1.442695
      %v812 = vpow.pop %v811
      %v813 = vmul.f32 %v789, 1.442695
      %v814 = vpow.pop %v813
      %v815 = vmul.f32 %v790, 1.442695
      %v816 = vpow.pop %v815
      %v817 = vmul.f32 %v791, 1.442695
      %v818 = vpow.pop %v817
      %v819 = vmul.f32 %v792, 1.442695
      %v820 = vpow.pop %v819
      %v821 = vmul.f32 %v793, 1.442695
      %v822 = vpow.pop %v821
      %v823 = vmul.f32 %v794, 1.442695
      %v824 = vpow.pop %v823
      %v825 = vmul.f32 %v795, 1.442695
      %v826 = vpow.pop %v825
      %v827 = vmul.f32 %v796, 1.442695
      %v828 = vpow.pop %v827
      %v829 = vadd.f32 %v798, 1.0
      %v830 = vadd.f32 %v800, 1.0
      %v831 = vadd.f32 %v802, 1.0
      %v832 = vadd.f32 %v804, 1.0
      %v833 = vadd.f32 %v806, 1.0
      %v834 = vadd.f32 %v808, 1.0
      %v835 = vadd.f32 %v810, 1.0
      %v836 = vadd.f32 %v812, 1.0
      %v837 = vadd.f32 %v814, 1.0
      %v838 = vadd.f32 %v816, 1.0
      %v839 = vadd.f32 %v818, 1.0
      %v840 = vadd.f32 %v820, 1.0
      %v841 = vadd.f32 %v822, 1.0
      %v842 = vadd.f32 %v824, 1.0
      %v843 = vadd.f32 %v826, 1.0
      %v844 = vadd.f32 %v828, 1.0
      %v845 = vrcp.pop %v829
      %v846 = vmul.f32 1.0, %v845
      %v847 = vrcp.pop %v830
      %v848 = vmul.f32 1.0, %v847
      %v849 = vrcp.pop %v831
      %v850 = vmul.f32 1.0, %v849
      %v851 = vrcp.pop %v832
      %v852 = vmul.f32 1.0, %v851
      %v853 = vrcp.pop %v833
      %v854 = vmul.f32 1.0, %v853
      %v855 = vrcp.pop %v834
      %v856 = vmul.f32 1.0, %v855
      %v857 = vrcp.pop %v835
      %v858 = vmul.f32 1.0, %v857
      %v859 = vrcp.pop %v836
      %v860 = vmul.f32 1.0, %v859
      %v861 = vrcp.pop %v837
      %v862 = vmul.f32 1.0, %v861
      %v863 = vrcp.pop %v838
      %v864 = vmul.f32 1.0, %v863
      %v865 = vrcp.pop %v839
      %v866 = vmul.f32 1.0, %v865
      %v867 = vrcp.pop %v840
      %v868 = vmul.f32 1.0, %v867
      %v869 = vrcp.pop %v841
      %v870 = vmul.f32 1.0, %v869
      %v871 = vrcp.pop %v842
      %v872 = vmul.f32 1.0, %v871
      %v873 = vrcp.pop %v843
      %v874 = vmul.f32 1.0, %v873
      %v875 = vrcp.pop %v844
      %v876 = vmul.f32 1.0, %v875
      %v877 = vsub.f32 %v331, %v347
      %v878 = vsub.f32 %v332, %v348
      %v879 = vsub.f32 %v333, %v349
      %v880 = vsub.f32 %v334, %v350
      %v881 = vsub.f32 %v335, %v351
      %v882 = vsub.f32 %v336, %v352
      %v883 = vsub.f32 %v337, %v353
      %v884 = vsub.f32 %v338, %v354
      %v885 = vsub.f32 %v339, %v355
      %v886 = vsub.f32 %v340, %v356
      %v887 = vsub.f32 %v341, %v357
      %v888 = vsub.f32 %v342, %v358
      %v889 = vsub.f32 %v343, %v359
      %v890 = vsub.f32 %v344, %v360
      %v891 = vsub.f32 %v345, %v361
      %v892 = vsub.f32 %v346, %v362
      %v893 = vmul.f32 %v846, %v877
      %v894 = vmul.f32 %v848, %v878
      %v895 = vmul.f32 %v850, %v879
      %v896 = vmul.f32 %v852, %v880
      %v897 = vmul.f32 %v854, %v881
      %v898 = vmul.f32 %v856, %v882
      %v899 = vmul.f32 %v858, %v883
      %v900 = vmul.f32 %v860, %v884
      %v901 = vmul.f32 %v862, %v885
      %v902 = vmul.f32 %v864, %v886
      %v903 = vmul.f32 %v866, %v887
      %v904 = vmul.f32 %v868, %v888
      %v905 = vmul.f32 %v870, %v889
      %v906 = vmul.f32 %v872, %v890
      %v907 = vmul.f32 %v874, %v891
      %v908 = vmul.f32 %v876, %v892
      %v909 = vadd.f32 %v347, %v893
      %v910 = vadd.f32 %v348, %v894
      %v911 = vadd.f32 %v349, %v895
      %v912 = vadd.f32 %v350, %v896
      %v913 = vadd.f32 %v351, %v897
      %v914 = vadd.f32 %v352, %v898
      %v915 = vadd.f32 %v353, %v899
      %v916 = vadd.f32 %v354, %v900
      %v917 = vadd.f32 %v355, %v901
      %v918 = vadd.f32 %v356, %v902
      %v919 = vadd.f32 %v357, %v903
      %v920 = vadd.f32 %v358, %v904
      %v921 = vadd.f32 %v359, %v905
      %v922 = vadd.f32 %v360, %v906
      %v923 = vadd.f32 %v361, %v907
      %v924 = vadd.f32 %v362, %v908
      %v925 = vld [vmem:[%s4] sm:$0xff]
      %v926 = vld [vmem:[%s4 + $0x8] sm:$0xff]
      %v927 = vld [vmem:[%s4 + $0x10] sm:$0xff]
      %v928 = vld [vmem:[%s4 + $0x18] sm:$0xff]
      %v929 = vld [vmem:[%s5] sm:$0x1]
      %v931 = vlaneseq
      %v932 = vshrl.u32 %v931, 7
      %v933 = vsub.s32 0, %v932
      %v934 = vrot.slane %v929, %v933
      %v937 = vsel %vm371, %v909, 0
      %v940 = vsel %vm371, %v910, 0
      %v943 = vsel %vm371, %v911, 0
      %v946 = vsel %vm371, %v912, 0
      %v949 = vsel %vm371, %v913, 0
      %v952 = vsel %vm371, %v914, 0
      %v955 = vsel %vm371, %v915, 0
      %v958 = vsel %vm371, %v916, 0
      %v961 = vsel %vm371, %v917, 0
      %v964 = vsel %vm371, %v918, 0
      %v967 = vsel %vm371, %v919, 0
      %v970 = vsel %vm371, %v920, 0
      %v973 = vsel %vm371, %v921, 0
      %v976 = vsel %vm371, %v922, 0
      %v979 = vsel %vm371, %v923, 0
      %v982 = vsel %vm371, %v924, 0
      %984 = vmatprep.subr.mxu0 0.0
      %985 = vmatpush1.msra.mxu0 0.0
      %986 = vmatprep.subr.mxu0 0.0
      %987 = vmatpush1.msra.mxu0 0.0
      %988 = vmatprep.subr.mxu0 0.0
      %989 = vmatpush1.msra.mxu0 0.0
      %990 = vmatprep.subr.mxu0 0.0
      %991 = vmatpush1.msra.mxu0 0.0
      %992 = vmatprep.subr.mxu0 0.0
      %993 = vmatpush1.msra.mxu0 0.0
      %994 = vmatprep.subr.mxu0 0.0
      %995 = vmatpush1.msra.mxu0 0.0
      %996 = vmatprep.subr.mxu0 0.0
      %997 = vmatpush1.msra.mxu0 0.0
      %998 = vmatprep.subr.mxu0 0.0
      %999 = vmatpush1.msra.mxu0 0.0
      %1000 = vmatprep.subr.mxu0 0.0
      %1001 = vmatpush1.msra.mxu0 0.0
      %1002 = vmatprep.subr.mxu0 0.0
      %1003 = vmatpush1.msra.mxu0 0.0
      %1004 = vmatprep.subr.mxu0 0.0
      %1005 = vmatpush1.msra.mxu0 0.0
      %1006 = vmatprep.subr.mxu0 0.0
      %1007 = vmatpush1.msra.mxu0 0.0
      %1008 = vmatprep.subr.mxu0 0.0
      %1009 = vmatpush1.msra.mxu0 %v928
      %1010 = vmatprep.subr.mxu0 0.0
      %1011 = vmatpush1.msra.mxu0 %v927
      %1012 = vmatprep.subr.mxu0 0.0
      %1013 = vmatpush1.msra.mxu0 %v926
      %1014 = vmatprep.subr.mxu0 0.0
      %1015 = vmatpush1.msra.mxu0 %v925
      %1016 = vmatprep.subr.mxu0 0.0
      %1017 = vmatpush2.msra.mxu0 0.0
      %1018 = vmatprep.subr.mxu0 0.0
      %1019 = vmatpush2.msra.mxu0 0.0
      %1020 = vmatprep.subr.mxu0 0.0
      %1021 = vmatpush2.msra.mxu0 0.0
      %1022 = vmatprep.subr.mxu0 0.0
      %1023 = vmatpush2.msra.mxu0 0.0
      %1024 = vmatprep.subr.mxu0 0.0
      %1025 = vmatpush2.msra.mxu0 0.0
      %1026 = vmatprep.subr.mxu0 0.0
      %1027 = vmatpush2.msra.mxu0 0.0
      %1028 = vmatprep.subr.mxu0 0.0
      %1029 = vmatpush2.msra.mxu0 0.0
      %1030 = vmatprep.subr.mxu0 0.0
      %1031 = vmatpush2.msra.mxu0 0.0
      %1032 = vmatprep.subr.mxu0 0.0
      %1033 = vmatpush2.msra.mxu0 0.0
      %1034 = vmatprep.subr.mxu0 0.0
      %1035 = vmatpush2.msra.mxu0 0.0
      %1036 = vmatprep.subr.mxu0 0.0
      %1037 = vmatpush2.msra.mxu0 0.0
      %1038 = vmatprep.subr.mxu0 0.0
      %1039 = vmatpush2.msra.mxu0 0.0
      %1040 = vmatprep.subr.mxu0 0.0
      %1041 = vmatpush2.msra.mxu0 0.0
      %1042 = vmatprep.subr.mxu0 0.0
      %1043 = vmatpush2.msra.mxu0 0.0
      %1044 = vmatprep.subr.mxu0 0.0
      %1045 = vmatpush2.msra.mxu0 0.0
      %1046 = vmatprep.subr.mxu0 0.0
      %1047 = vmatpush2.msra.mxu0 0.0
      %1048 = vmatprep.mubr.f32.mxu0 0.0
      %1049 = vmatmul.mubr.f32.gmra.mxu0 %v937
      %v1050 = vpop.f32.mrf.mxu0
      %v1051 = vadd.f32 %v934, %v1050
      %v1052 = vpop.f32.mrf.mxu0
      %1053 = vmatprep.mubr.f32.mxu0 0.0
      %1054 = vmatmul.mubr.f32.gmra.mxu0 %v940
      %v1055 = vpop.f32.mrf.mxu0
      %v1056 = vadd.f32 %v934, %v1055
      %v1057 = vpop.f32.mrf.mxu0
      %1058 = vmatprep.mubr.f32.mxu0 0.0
      %1059 = vmatmul.mubr.f32.gmra.mxu0 %v943
      %v1060 = vpop.f32.mrf.mxu0
      %v1061 = vadd.f32 %v934, %v1060
      %v1062 = vpop.f32.mrf.mxu0
      %1063 = vmatprep.mubr.f32.mxu0 0.0
      %1064 = vmatmul.mubr.f32.gmra.mxu0 %v946
      %v1065 = vpop.f32.mrf.mxu0
      %v1066 = vadd.f32 %v934, %v1065
      %v1067 = vpop.f32.mrf.mxu0
      %1068 = vmatprep.mubr.f32.mxu0 0.0
      %1069 = vmatmul.mubr.f32.gmra.mxu0 %v949
      %v1070 = vpop.f32.mrf.mxu0
      %v1071 = vadd.f32 %v934, %v1070
      %v1072 = vpop.f32.mrf.mxu0
      %1073 = vmatprep.mubr.f32.mxu0 0.0
      %1074 = vmatmul.mubr.f32.gmra.mxu0 %v952
      %v1075 = vpop.f32.mrf.mxu0
      %v1076 = vadd.f32 %v934, %v1075
      %v1077 = vpop.f32.mrf.mxu0
      %1078 = vmatprep.mubr.f32.mxu0 0.0
      %1079 = vmatmul.mubr.f32.gmra.mxu0 %v955
      %v1080 = vpop.f32.mrf.mxu0
      %v1081 = vadd.f32 %v934, %v1080
      %v1082 = vpop.f32.mrf.mxu0
      %1083 = vmatprep.mubr.f32.mxu0 0.0
      %1084 = vmatmul.mubr.f32.gmra.mxu0 %v958
      %v1085 = vpop.f32.mrf.mxu0
      %v1086 = vadd.f32 %v934, %v1085
      %v1087 = vpop.f32.mrf.mxu0
      %1088 = vmatprep.mubr.f32.mxu0 0.0
      %1089 = vmatmul.mubr.f32.gmra.mxu0 %v961
      %v1090 = vpop.f32.mrf.mxu0
      %v1091 = vadd.f32 %v934, %v1090
      %v1092 = vpop.f32.mrf.mxu0
      %1093 = vmatprep.mubr.f32.mxu0 0.0
      %1094 = vmatmul.mubr.f32.gmra.mxu0 %v964
      %v1095 = vpop.f32.mrf.mxu0
      %v1096 = vadd.f32 %v934, %v1095
      %v1097 = vpop.f32.mrf.mxu0
      %1098 = vmatprep.mubr.f32.mxu0 0.0
      %1099 = vmatmul.mubr.f32.gmra.mxu0 %v967
      %v1100 = vpop.f32.mrf.mxu0
      %v1101 = vadd.f32 %v934, %v1100
      %v1102 = vpop.f32.mrf.mxu0
      %1103 = vmatprep.mubr.f32.mxu0 0.0
      %1104 = vmatmul.mubr.f32.gmra.mxu0 %v970
      %v1105 = vpop.f32.mrf.mxu0
      %v1106 = vadd.f32 %v934, %v1105
      %v1107 = vpop.f32.mrf.mxu0
      %1108 = vmatprep.mubr.f32.mxu0 0.0
      %1109 = vmatmul.mubr.f32.gmra.mxu0 %v973
      %v1110 = vpop.f32.mrf.mxu0
      %v1111 = vadd.f32 %v934, %v1110
      %v1112 = vpop.f32.mrf.mxu0
      %1113 = vmatprep.mubr.f32.mxu0 0.0
      %1114 = vmatmul.mubr.f32.gmra.mxu0 %v976
      %v1115 = vpop.f32.mrf.mxu0
      %v1116 = vadd.f32 %v934, %v1115
      %v1117 = vpop.f32.mrf.mxu0
      %1118 = vmatprep.mubr.f32.mxu0 0.0
      %1119 = vmatmul.mubr.f32.gmra.mxu0 %v979
      %v1120 = vpop.f32.mrf.mxu0
      %v1121 = vadd.f32 %v934, %v1120
      %v1122 = vpop.f32.mrf.mxu0
      %1123 = vmatprep.mubr.f32.mxu0 0.0
      %1124 = vmatmul.mubr.f32.gmra.mxu0 %v982
      %v1125 = vpop.f32.mrf.mxu0
      %v1126 = vadd.f32 %v934, %v1125
      %v1127 = vpop.f32.mrf.mxu0
      %1128 = vdwg.mxu0
      %v1129 = vmax.f32 %v1051, 0.0
      %v1130 = vmax.f32 %v1056, 0.0
      %v1131 = vmax.f32 %v1061, 0.0
      %v1132 = vmax.f32 %v1066, 0.0
      %v1133 = vmax.f32 %v1071, 0.0
      %v1134 = vmax.f32 %v1076, 0.0
      %v1135 = vmax.f32 %v1081, 0.0
      %v1136 = vmax.f32 %v1086, 0.0
      %v1137 = vmax.f32 %v1091, 0.0
      %v1138 = vmax.f32 %v1096, 0.0
      %v1139 = vmax.f32 %v1101, 0.0
      %v1140 = vmax.f32 %v1106, 0.0
      %v1141 = vmax.f32 %v1111, 0.0
      %v1142 = vmax.f32 %v1116, 0.0
      %v1143 = vmax.f32 %v1121, 0.0
      %v1144 = vmax.f32 %v1126, 0.0
      %v1145 = vld [vmem:[%s6] sm:$0xff]
      %v1146 = vld [vmem:[%s6 + $0x8] sm:$0xff]
      %v1147 = vld [vmem:[%s6 + $0x10] sm:$0xff]
      %v1148 = vld [vmem:[%s6 + $0x18] sm:$0xff]
      %v1149 = vld [vmem:[%s7] sm:$0x1]
      %v1151 = vlaneseq
      %v1152 = vshrl.u32 %v1151, 7
      %v1153 = vsub.s32 0, %v1152
      %v1154 = vrot.slane %v1149, %v1153
      %v1157 = vsel %vm371, %v1129, 0
      %v1160 = vsel %vm371, %v1130, 0
      %v1163 = vsel %vm371, %v1131, 0
      %v1166 = vsel %vm371, %v1132, 0
      %v1169 = vsel %vm371, %v1133, 0
      %v1172 = vsel %vm371, %v1134, 0
      %v1175 = vsel %vm371, %v1135, 0
      %v1178 = vsel %vm371, %v1136, 0
      %v1181 = vsel %vm371, %v1137, 0
      %v1184 = vsel %vm371, %v1138, 0
      %v1187 = vsel %vm371, %v1139, 0
      %v1190 = vsel %vm371, %v1140, 0
      %v1193 = vsel %vm371, %v1141, 0
      %v1196 = vsel %vm371, %v1142, 0
      %v1199 = vsel %vm371, %v1143, 0
      %v1202 = vsel %vm371, %v1144, 0
      %1204 = vmatprep.subr.mxu0 0.0
      %1205 = vmatpush1.msra.mxu0 0.0
      %1206 = vmatprep.subr.mxu0 0.0
      %1207 = vmatpush1.msra.mxu0 0.0
      %1208 = vmatprep.subr.mxu0 0.0
      %1209 = vmatpush1.msra.mxu0 0.0
      %1210 = vmatprep.subr.mxu0 0.0
      %1211 = vmatpush1.msra.mxu0 0.0
      %1212 = vmatprep.subr.mxu0 0.0
      %1213 = vmatpush1.msra.mxu0 0.0
      %1214 = vmatprep.subr.mxu0 0.0
      %1215 = vmatpush1.msra.mxu0 0.0
      %1216 = vmatprep.subr.mxu0 0.0
      %1217 = vmatpush1.msra.mxu0 0.0
      %1218 = vmatprep.subr.mxu0 0.0
      %1219 = vmatpush1.msra.mxu0 0.0
      %1220 = vmatprep.subr.mxu0 0.0
      %1221 = vmatpush1.msra.mxu0 0.0
      %1222 = vmatprep.subr.mxu0 0.0
      %1223 = vmatpush1.msra.mxu0 0.0
      %1224 = vmatprep.subr.mxu0 0.0
      %1225 = vmatpush1.msra.mxu0 0.0
      %1226 = vmatprep.subr.mxu0 0.0
      %1227 = vmatpush1.msra.mxu0 0.0
      %1228 = vmatprep.subr.mxu0 0.0
      %1229 = vmatpush1.msra.mxu0 %v1148
      %1230 = vmatprep.subr.mxu0 0.0
      %1231 = vmatpush1.msra.mxu0 %v1147
      %1232 = vmatprep.subr.mxu0 0.0
      %1233 = vmatpush1.msra.mxu0 %v1146
      %1234 = vmatprep.subr.mxu0 0.0
      %1235 = vmatpush1.msra.mxu0 %v1145
      %1236 = vmatprep.subr.mxu0 0.0
      %1237 = vmatpush2.msra.mxu0 0.0
      %1238 = vmatprep.subr.mxu0 0.0
      %1239 = vmatpush2.msra.mxu0 0.0
      %1240 = vmatprep.subr.mxu0 0.0
      %1241 = vmatpush2.msra.mxu0 0.0
      %1242 = vmatprep.subr.mxu0 0.0
      %1243 = vmatpush2.msra.mxu0 0.0
      %1244 = vmatprep.subr.mxu0 0.0
      %1245 = vmatpush2.msra.mxu0 0.0
      %1246 = vmatprep.subr.mxu0 0.0
      %1247 = vmatpush2.msra.mxu0 0.0
      %1248 = vmatprep.subr.mxu0 0.0
      %1249 = vmatpush2.msra.mxu0 0.0
      %1250 = vmatprep.subr.mxu0 0.0
      %1251 = vmatpush2.msra.mxu0 0.0
      %1252 = vmatprep.subr.mxu0 0.0
      %1253 = vmatpush2.msra.mxu0 0.0
      %1254 = vmatprep.subr.mxu0 0.0
      %1255 = vmatpush2.msra.mxu0 0.0
      %1256 = vmatprep.subr.mxu0 0.0
      %1257 = vmatpush2.msra.mxu0 0.0
      %1258 = vmatprep.subr.mxu0 0.0
      %1259 = vmatpush2.msra.mxu0 0.0
      %1260 = vmatprep.subr.mxu0 0.0
      %1261 = vmatpush2.msra.mxu0 0.0
      %1262 = vmatprep.subr.mxu0 0.0
      %1263 = vmatpush2.msra.mxu0 0.0
      %1264 = vmatprep.subr.mxu0 0.0
      %1265 = vmatpush2.msra.mxu0 0.0
      %1266 = vmatprep.subr.mxu0 0.0
      %1267 = vmatpush2.msra.mxu0 0.0
      %1268 = vmatprep.mubr.f32.mxu0 0.0
      %1269 = vmatmul.mubr.f32.gmra.mxu0 %v1157
      %v1270 = vpop.f32.mrf.mxu0
      %v1271 = vadd.f32 %v1154, %v1270
      %v1272 = vpop.f32.mrf.mxu0
      %1273 = vmatprep.mubr.f32.mxu0 0.0
      %1274 = vmatmul.mubr.f32.gmra.mxu0 %v1160
      %v1275 = vpop.f32.mrf.mxu0
      %v1276 = vadd.f32 %v1154, %v1275
      %v1277 = vpop.f32.mrf.mxu0
      %1278 = vmatprep.mubr.f32.mxu0 0.0
      %1279 = vmatmul.mubr.f32.gmra.mxu0 %v1163
      %v1280 = vpop.f32.mrf.mxu0
      %v1281 = vadd.f32 %v1154, %v1280
      %v1282 = vpop.f32.mrf.mxu0
      %1283 = vmatprep.mubr.f32.mxu0 0.0
      %1284 = vmatmul.mubr.f32.gmra.mxu0 %v1166
      %v1285 = vpop.f32.mrf.mxu0
      %v1286 = vadd.f32 %v1154, %v1285
      %v1287 = vpop.f32.mrf.mxu0
      %1288 = vmatprep.mubr.f32.mxu0 0.0
      %1289 = vmatmul.mubr.f32.gmra.mxu0 %v1169
      %v1290 = vpop.f32.mrf.mxu0
      %v1291 = vadd.f32 %v1154, %v1290
      %v1292 = vpop.f32.mrf.mxu0
      %1293 = vmatprep.mubr.f32.mxu0 0.0
      %1294 = vmatmul.mubr.f32.gmra.mxu0 %v1172
      %v1295 = vpop.f32.mrf.mxu0
      %v1296 = vadd.f32 %v1154, %v1295
      %v1297 = vpop.f32.mrf.mxu0
      %1298 = vmatprep.mubr.f32.mxu0 0.0
      %1299 = vmatmul.mubr.f32.gmra.mxu0 %v1175
      %v1300 = vpop.f32.mrf.mxu0
      %v1301 = vadd.f32 %v1154, %v1300
      %v1302 = vpop.f32.mrf.mxu0
      %1303 = vmatprep.mubr.f32.mxu0 0.0
      %1304 = vmatmul.mubr.f32.gmra.mxu0 %v1178
      %v1305 = vpop.f32.mrf.mxu0
      %v1306 = vadd.f32 %v1154, %v1305
      %v1307 = vpop.f32.mrf.mxu0
      %1308 = vmatprep.mubr.f32.mxu0 0.0
      %1309 = vmatmul.mubr.f32.gmra.mxu0 %v1181
      %v1310 = vpop.f32.mrf.mxu0
      %v1311 = vadd.f32 %v1154, %v1310
      %v1312 = vpop.f32.mrf.mxu0
      %1313 = vmatprep.mubr.f32.mxu0 0.0
      %1314 = vmatmul.mubr.f32.gmra.mxu0 %v1184
      %v1315 = vpop.f32.mrf.mxu0
      %v1316 = vadd.f32 %v1154, %v1315
      %v1317 = vpop.f32.mrf.mxu0
      %1318 = vmatprep.mubr.f32.mxu0 0.0
      %1319 = vmatmul.mubr.f32.gmra.mxu0 %v1187
      %v1320 = vpop.f32.mrf.mxu0
      %v1321 = vadd.f32 %v1154, %v1320
      %v1322 = vpop.f32.mrf.mxu0
      %1323 = vmatprep.mubr.f32.mxu0 0.0
      %1324 = vmatmul.mubr.f32.gmra.mxu0 %v1190
      %v1325 = vpop.f32.mrf.mxu0
      %v1326 = vadd.f32 %v1154, %v1325
      %v1327 = vpop.f32.mrf.mxu0
      %1328 = vmatprep.mubr.f32.mxu0 0.0
      %1329 = vmatmul.mubr.f32.gmra.mxu0 %v1193
      %v1330 = vpop.f32.mrf.mxu0
      %v1331 = vadd.f32 %v1154, %v1330
      %v1332 = vpop.f32.mrf.mxu0
      %1333 = vmatprep.mubr.f32.mxu0 0.0
      %1334 = vmatmul.mubr.f32.gmra.mxu0 %v1196
      %v1335 = vpop.f32.mrf.mxu0
      %v1336 = vadd.f32 %v1154, %v1335
      %v1337 = vpop.f32.mrf.mxu0
      %1338 = vmatprep.mubr.f32.mxu0 0.0
      %1339 = vmatmul.mubr.f32.gmra.mxu0 %v1199
      %v1340 = vpop.f32.mrf.mxu0
      %v1341 = vadd.f32 %v1154, %v1340
      %v1342 = vpop.f32.mrf.mxu0
      %1343 = vmatprep.mubr.f32.mxu0 0.0
      %1344 = vmatmul.mubr.f32.gmra.mxu0 %v1202
      %v1345 = vpop.f32.mrf.mxu0
      %v1346 = vadd.f32 %v1154, %v1345
      %v1347 = vpop.f32.mrf.mxu0
      %1348 = vdwg.mxu0
      %1349 = vst.msk [vmem:[%s329] sm:$0xff] %vm371, %v1271
      %1350 = vst.msk [vmem:[%s329 + $0x8] sm:$0xff] %vm371, %v1276
      %1351 = vst.msk [vmem:[%s329 + $0x10] sm:$0xff] %vm371, %v1281
      %1352 = vst.msk [vmem:[%s329 + $0x18] sm:$0xff] %vm371, %v1286
      %1353 = vst.msk [vmem:[%s329 + $0x20] sm:$0xff] %vm371, %v1291
      %1354 = vst.msk [vmem:[%s329 + $0x28] sm:$0xff] %vm371, %v1296
      %1355 = vst.msk [vmem:[%s329 + $0x30] sm:$0xff] %vm371, %v1301
      %1356 = vst.msk [vmem:[%s329 + $0x38] sm:$0xff] %vm371, %v1306
      %1357 = vst.msk [vmem:[%s329 + $0x40] sm:$0xff] %vm371, %v1311
      %1358 = vst.msk [vmem:[%s329 + $0x48] sm:$0xff] %vm371, %v1316
      %1359 = vst.msk [vmem:[%s329 + $0x50] sm:$0xff] %vm371, %v1321
      %1360 = vst.msk [vmem:[%s329 + $0x58] sm:$0xff] %vm371, %v1326
      %1361 = vst.msk [vmem:[%s329 + $0x60] sm:$0xff] %vm371, %v1331
      %1362 = vst.msk [vmem:[%s329 + $0x68] sm:$0xff] %vm371, %v1336
      %1363 = vst.msk [vmem:[%s329 + $0x70] sm:$0xff] %vm371, %v1341
      %1364 = vst.msk [vmem:[%s329 + $0x78] sm:$0xff] %vm371, %v1346
      %s1365 = smul.u32 16, %s19
      %p1366 = scmp.lt.s32.totalorder %s1365, 31
      %s1367 = scalar_select %p1366, %s1365, 31
      %s1368 = smul.addr %s1367, 8
      %s1369 = scalar_lea.vmem %s8, %s1368
      // Predicated region
      $region53: #{tpu_custom_call.1} parent=51 // pred_check
        %p1370 = pneg %p215
      $region54: #{tpu_custom_call.1} parent=51 // pred_check_branch
        %1372 = sbr.rel (%p1370) target = $region56
      $region55: #{tpu_custom_call.1} parent=51 // pred_region
        %s1373 = smul.u32 16, %s19
      $region56: #{tpu_custom_call.1} parent=51 // pred_fallthru
        _
    $region52: #{tpu_custom_call.1} parent=5 // pred_fallthru
      _
    %p1374 = scmp.le.s32.totalorder 2, %s14
    // Predicated region
    $region57: #{tpu_custom_call.1} parent=5 // pred_check
      %p1375 = pneg %p1374
    $region58: #{tpu_custom_call.1} parent=5 // pred_check_branch
      %1377 = sbr.rel (%p1375) target = $region60
    $region59: #{tpu_custom_call.1} parent=5 // pred_region
      %s1378 = ssub.s32 %s14, 2
      // Predicated region
      $region61: #{tpu_custom_call.1} parent=59 // pred_check
        %p1379 = pneg %p221
      $region62: #{tpu_custom_call.1} parent=59 // pred_check_branch
        %1381 = sbr.rel (%p1379) target = $region64
      $region63: #{tpu_custom_call.1} parent=59 // pred_region
        %s1382 = smul.u32 16, %s20
        %p1383 = scmp.lt.s32.totalorder %s1382, 31
        %s1384 = scalar_select %p1383, %s1382, 31
        %s1385 = smul.addr %s1384, 8
        %s1386 = scalar_lea.vmem %s8, %s1385
      $region64: #{tpu_custom_call.1} parent=59 // pred_fallthru
        _
    $region60: #{tpu_custom_call.1} parent=5 // pred_fallthru
      _
  $region6: #{tpu_custom_call.1} parent=0 // loop_footer
    %s18 = sadd.s32 1, %s14
  $region7: #{tpu_custom_call.1} parent=0 // loop_footer_branch
    %13 = sbr.rel target = $region3
  $region8: #{tpu_custom_call.1} parent=0 // loop_exit
    _

</llo_original>
